<compile_context>
chip_gen: v5e
topology: v5e:2x2
jax: 0.10.0
libtpu: 0.0.40
codegen_flags: <defaults>
</compile_context>

<pallas_src>
import functools

import jax
import jax.numpy as jnp
from jax.experimental import pallas as pl
from jax.experimental.pallas import tpu as pltpu

TILE_HW_MAX = 32768                # max pixel lanes per grid step
VMEM_BUDGET = 10 * 1024 * 1024     # conservative: fits default scoped VMEM on all chips


def _wce_kernel(pred_ref, tgt_ref, cnt_out_ref, nll_out_ref,
                cnt_acc, nll_acc, *, hw, tile_hw, out_w):
    # pred_ref: (C, tile_hw) logits for one batch element / pixel tile
    # tgt_ref:  (1, tile_hw) int32 labels
    # cnt_acc / nll_acc: (C, tile_hw) f32 VMEM scratch accumulators, persistent
    #   across the inner (pixel-tile) grid axis.
    # cnt_out_ref / nll_out_ref: (C, out_w) lane-dense per-batch partial sums,
    #   written only on the last inner step.
    i = pl.program_id(1)

    @pl.when(i == 0)
    def _():
        cnt_acc[...] = jnp.zeros_like(cnt_acc)
        nll_acc[...] = jnp.zeros_like(nll_acc)

    logits = pred_ref[...].astype(jnp.float32)                      # (C, T)
    tgt = tgt_ref[...]                                              # (1, T)

    # lane-validity mask for the ragged tail tile (no wrapper-side padding)
    lane = jax.lax.broadcasted_iota(jnp.int32, (1, tile_hw), 1)
    valid = (i * tile_hw + lane) < hw                               # (1, T)

    class_ids = jax.lax.broadcasted_iota(jnp.int32, logits.shape, 0)
    hit = (class_ids == tgt) & valid                                # (C, T)

    # numerically-stable log-softmax over the class (sublane) axis
    m = jnp.max(logits, axis=0, keepdims=True)                      # (1, T)
    lse = jnp.log(jnp.sum(jnp.exp(logits - m), axis=0, keepdims=True)) + m
    nll = lse - logits                                              # -log p_c

    cnt_acc[...] += hit.astype(jnp.float32)
    nll_acc[...] += jnp.where(hit, nll, 0.0)

    # Last inner step: fold the wide accumulators down to lane-dense (C, out_w)
    # partials (128-lane aligned static slices -> pure VPU adds, no relayout).
    @pl.when(i == pl.num_programs(1) - 1)
    def _():
        cnt = cnt_acc[:, 0:out_w]
        nls = nll_acc[:, 0:out_w]
        for g in range(1, tile_hw // out_w):
            lo = g * out_w
            cnt = cnt + cnt_acc[:, lo:lo + out_w]
            nls = nls + nll_acc[:, lo:lo + out_w]
        cnt_out_ref[...] = cnt
        nll_out_ref[...] = nls


def weighted_cross_entropy_loss(predict, target, num_classes, tile_hw=None):
    """predict: (N, C, H, W) float logits; target: (N, H, W) or (N, 1, H, W) ints."""
    N, C, H, W = predict.shape
    assert C == num_classes

    if target.ndim == predict.ndim:
        assert target.shape[1] == 1
        target = target[:, 0]
    target = target.astype(jnp.int32)

    HW = H * W
    pred3d = predict.reshape(N, C, HW)      # contiguous reshape, no copy
    tgt3d = target.reshape(N, 1, HW)

    if tile_hw is None:
        if HW < 128:
            tile_hw = HW                    # full row (legal: equals full dim)
        else:
            itemsize = jnp.dtype(predict.dtype).itemsize
            # dbl-buffered logits + 2 f32 scratch accs + dbl-buffered int32 target
            per_lane = C * (2 * itemsize + 8) + 8
            cap = max(128, min(VMEM_BUDGET // per_lane, TILE_HW_MAX))
            tile_hw = (min(HW, cap) // 128) * 128   # lane-aligned tile
    n_tiles = pl.cdiv(HW, tile_hw)
    out_w = min(tile_hw, 128)

    kernel = functools.partial(_wce_kernel, hw=HW, tile_hw=tile_hw, out_w=out_w)

    cnt_part, nll_part = pl.pallas_call(
        kernel,
        out_shape=(
            jax.ShapeDtypeStruct((N, C, out_w), jnp.float32),
            jax.ShapeDtypeStruct((N, C, out_w), jnp.float32),
        ),
        grid_spec=pl.GridSpec(
            grid=(N, n_tiles),
            in_specs=[
                pl.BlockSpec((None, C, tile_hw), lambda n, i: (n, 0, i)),
                pl.BlockSpec((None, 1, tile_hw), lambda n, i: (n, 0, i)),
            ],
            out_specs=[
                pl.BlockSpec((None, C, out_w), lambda n, i: (n, 0, 0)),
                pl.BlockSpec((None, C, out_w), lambda n, i: (n, 0, 0)),
            ],
            scratch_shapes=[
                pltpu.VMEM((C, tile_hw), jnp.float32),
                pltpu.VMEM((C, tile_hw), jnp.float32),
            ],
        ),
        compiler_params=pltpu.CompilerParams(
            dimension_semantics=("parallel", "arbitrary"),
        ),
    )(pred3d, tgt3d)

    # counts accumulated in f32; per-lane partials stay small, exact in practice
    counts = jnp.sum(cnt_part, axis=(0, 2))    # (C,) counts of target == c
    nll_sum = jnp.sum(nll_part, axis=(0, 2))   # (C,) sum of -log p_{target}

    # exact reproduction of the PyTorch weight construction
    w = counts + 1e-05
    w = 1.0 - w / jnp.sum(w) + 1e-05

    # F.cross_entropy(..., weight, reduction='mean'):
    #   sum_i w[y_i] * nll_i / sum_i w[y_i]
    numer = jnp.sum(w * nll_sum)
    denom = jnp.sum(w * counts)
    return numer / denom


def _reference(predict, target, num_classes):
    # pure-JAX reference mirroring the PyTorch module, for a sanity check
    if target.ndim == predict.ndim:
        target = target[:, 0]
    target = target.astype(jnp.int32)
    counts = jnp.array(
        [jnp.sum(target == c).astype(jnp.float32) for c in range(num_classes)]
    )
    w = counts + 1e-05
    w = 1.0 - w / jnp.sum(w) + 1e-05
    logp = jax.nn.log_softmax(predict.astype(jnp.float32), axis=1)   # (N,C,H,W)
    nll = -jnp.take_along_axis(logp, target[:, None], axis=1)[:, 0]  # (N,H,W)
    wi = w[target]
    return jnp.sum(wi * nll) / jnp.sum(wi)


if __name__ == "__main__":
    key = jax.random.PRNGKey(0)

    # test 1: canonical small shape, single 256-lane tile (out_w = 128, 2 groups)
    k1, k2 = jax.random.split(key)
    N, C, H, W = 2, 4, 16, 16
    predict = jax.random.normal(k1, (N, C, H, W), dtype=jnp.float32)
    target = jax.random.randint(k2, (N, 1, H, W), 0, C, dtype=jnp.int32)

    loss = weighted_cross_entropy_loss(predict, target, num_classes=C)
    loss = jax.block_until_ready(loss)
    ref = _reference(predict, target, num_classes=C)
    assert jnp.allclose(loss, ref, rtol=1e-5, atol=1e-5), (loss, ref)

    # test 2: ragged tail — HW = 400 pixels with a forced 128-lane tile (last
    # tile only 16 valid lanes), exercising the in-kernel validity mask
    k3, k4 = jax.random.split(k1)
    N2, C2, H2, W2 = 2, 4, 20, 20
    predict2 = jax.random.normal(k3, (N2, C2, H2, W2), dtype=jnp.float32)
    target2 = jax.random.randint(k4, (N2, H2, W2), 0, C2, dtype=jnp.int32)

    loss2 = weighted_cross_entropy_loss(predict2, target2, num_classes=C2,
                                        tile_hw=128)
    loss2 = jax.block_until_ready(loss2)
    ref2 = _reference(predict2, target2, num_classes=C2)
    assert jnp.allclose(loss2, ref2, rtol=1e-5, atol=1e-5), (loss2, ref2)

    # test 3: auto tile choice on a non-multiple-of-128 row (tile rounded down
    # to 384, ragged last block) + bf16 logits upcast in-kernel
    predict3 = predict2.astype(jnp.bfloat16)
    loss3 = weighted_cross_entropy_loss(predict3, target2, num_classes=C2)
    loss3 = jax.block_until_ready(loss3)
    ref3 = _reference(predict3, target2, num_classes=C2)
    assert jnp.allclose(loss3, ref3, rtol=2e-2, atol=2e-2), (loss3, ref3)

    print("KERNEL_OK")
</pallas_src>

<mosaic_0001>
module attributes {stable_mosaic.version = 11 : i64} {
  func.func @_wce_kernel(%arg0: i32, %arg1: i32, %arg2: memref<1x4x256xf32, #tpu.memory_space<vmem>>, %arg3: memref<1x1x256xi32, #tpu.memory_space<vmem>>, %arg4: memref<1x4x128xf32, #tpu.memory_space<vmem>>, %arg5: memref<1x4x128xf32, #tpu.memory_space<vmem>>, %arg6: memref<4x256xf32, #tpu.memory_space<vmem>>, %arg7: memref<4x256xf32, #tpu.memory_space<vmem>>) attributes {dimension_semantics = [#tpu.dimension_semantics<parallel>, #tpu.dimension_semantics<arbitrary>], iteration_bounds = array<i64: 2, 1>, scalar_prefetch = 0 : i64, scratch_operands = 2 : i64, tpu.core_type = #tpu.core_type<tc>, window_params = [{transform_indices = @transform_0, window_bounds = array<i64: 1, 4, 256>}, {transform_indices = @transform_1, window_bounds = array<i64: 1, 1, 256>}, {transform_indices = @transform_2, window_bounds = array<i64: 1, 4, 128>}, {transform_indices = @transform_3, window_bounds = array<i64: 1, 4, 128>}]} {
    %c0_i32 = arith.constant 0 : i32
    %0 = arith.cmpi eq, %arg1, %c0_i32 : i32
    %1 = arith.extui %0 : i1 to i32
    %c0_i32_0 = arith.constant 0 : i32
    %2 = arith.cmpi ne, %1, %c0_i32_0 : i32
    scf.if %2 {
      %cst_19 = arith.constant 0.000000e+00 : f32
      %42 = vector.broadcast %cst_19 : f32 to vector<4x256xf32>
      %c0_20 = arith.constant 0 : index
      %c0_21 = arith.constant 0 : index
      %43 = vector.load %arg6[%c0_20, %c0_21] : memref<4x256xf32, #tpu.memory_space<vmem>>, vector<4x256xf32>
      tpu.vector_store %arg6[%c0_20, %c0_21], %42 {strides = array<i32>} : memref<4x256xf32, #tpu.memory_space<vmem>>, vector<4x256xf32>,
      %cst_22 = arith.constant 0.000000e+00 : f32
      %44 = vector.broadcast %cst_22 : f32 to vector<4x256xf32>
      %c0_23 = arith.constant 0 : index
      %c0_24 = arith.constant 0 : index
      %45 = vector.load %arg7[%c0_23, %c0_24] : memref<4x256xf32, #tpu.memory_space<vmem>>, vector<4x256xf32>
      tpu.vector_store %arg7[%c0_23, %c0_24], %44 {strides = array<i32>} : memref<4x256xf32, #tpu.memory_space<vmem>>, vector<4x256xf32>,
    } else {
    }
    %c0 = arith.constant 0 : index
    %c0_1 = arith.constant 0 : index
    %c0_2 = arith.constant 0 : index
    %3 = vector.load %arg2[%c0, %c0_1, %c0_2] : memref<1x4x256xf32, #tpu.memory_space<vmem>>, vector<1x4x256xf32>
    %4 = vector.shape_cast %3 : vector<1x4x256xf32> to vector<4x256xf32>
    %c0_3 = arith.constant 0 : index
    %c0_4 = arith.constant 0 : index
    %c0_5 = arith.constant 0 : index
    %5 = vector.load %arg3[%c0_3, %c0_4, %c0_5] : memref<1x1x256xi32, #tpu.memory_space<vmem>>, vector<1x1x256xi32>
    %6 = vector.shape_cast %5 : vector<1x1x256xi32> to vector<1x256xi32>
    %7 = tpu.iota {dimensions = array<i32: 1>} : vector<1x256xi32>
    %c256_i32 = arith.constant 256 : i32
    %8 = arith.muli %arg1, %c256_i32 : i32
    %9 = vector.broadcast %8 : i32 to vector<1x256xi32>
    %10 = arith.addi %9, %7 : vector<1x256xi32>
    %c256_i32_6 = arith.constant 256 : i32
    %11 = vector.broadcast %c256_i32_6 : i32 to vector<1x256xi32>
    %12 = arith.cmpi slt, %10, %11 : vector<1x256xi32>
    %13 = tpu.iota {dimensions = array<i32: 0>} : vector<4x256xi32>
    %14 = vector.broadcast %6 : vector<1x256xi32> to vector<4x256xi32>
    %15 = arith.cmpi eq, %13, %14 : vector<4x256xi32>
    %16 = vector.broadcast %12 : vector<1x256xi1> to vector<4x256xi1>
    %17 = arith.andi %15, %16 : vector<4x256xi1>
    %cst = arith.constant dense<0xFF800000> : vector<256xf32>
    %18 = vector.multi_reduction <maximumf>, %4, %cst [0] : vector<4x256xf32> to vector<256xf32>
    %19 = vector.shape_cast %18 : vector<256xf32> to vector<1x256xf32>
    %20 = vector.broadcast %19 : vector<1x256xf32> to vector<4x256xf32>
    %21 = arith.subf %4, %20 : vector<4x256xf32>
    %22 = math.exp %21 : vector<4x256xf32>
    %cst_7 = arith.constant dense<0.000000e+00> : vector<256xf32>
    %23 = vector.multi_reduction <add>, %22, %cst_7 [0] : vector<4x256xf32> to vector<256xf32>
    %24 = vector.shape_cast %23 : vector<256xf32> to vector<1x256xf32>
    %25 = math.log %24 : vector<1x256xf32>
    %26 = arith.addf %25, %19 : vector<1x256xf32>
    %27 = vector.broadcast %26 : vector<1x256xf32> to vector<4x256xf32>
    %28 = arith.subf %27, %4 : vector<4x256xf32>
    %c0_8 = arith.constant 0 : index
    %c0_9 = arith.constant 0 : index
    %29 = vector.load %arg6[%c0_8, %c0_9] : memref<4x256xf32, #tpu.memory_space<vmem>>, vector<4x256xf32>
    %30 = arith.extui %17 : vector<4x256xi1> to vector<4x256xi32>
    %31 = arith.sitofp %30 : vector<4x256xi32> to vector<4x256xf32>
    %32 = arith.addf %29, %31 : vector<4x256xf32>
    %c0_10 = arith.constant 0 : index
    %c0_11 = arith.constant 0 : index
    %33 = vector.load %arg6[%c0_10, %c0_11] : memref<4x256xf32, #tpu.memory_space<vmem>>, vector<4x256xf32>
    tpu.vector_store %arg6[%c0_10, %c0_11], %32 {strides = array<i32>} : memref<4x256xf32, #tpu.memory_space<vmem>>, vector<4x256xf32>,
    %c0_12 = arith.constant 0 : index
    %c0_13 = arith.constant 0 : index
    %34 = vector.load %arg7[%c0_12, %c0_13] : memref<4x256xf32, #tpu.memory_space<vmem>>, vector<4x256xf32>
    %cst_14 = arith.constant 0.000000e+00 : f32
    %35 = vector.broadcast %cst_14 : f32 to vector<4x256xf32>
    %36 = arith.select %17, %28, %35 : vector<4x256xi1>, vector<4x256xf32>
    %37 = arith.addf %34, %36 : vector<4x256xf32>
    %c0_15 = arith.constant 0 : index
    %c0_16 = arith.constant 0 : index
    %38 = vector.load %arg7[%c0_15, %c0_16] : memref<4x256xf32, #tpu.memory_space<vmem>>, vector<4x256xf32>
    tpu.vector_store %arg7[%c0_15, %c0_16], %37 {strides = array<i32>} : memref<4x256xf32, #tpu.memory_space<vmem>>, vector<4x256xf32>,
    %c0_i32_17 = arith.constant 0 : i32
    %39 = arith.cmpi eq, %arg1, %c0_i32_17 : i32
    %40 = arith.extui %39 : i1 to i32
    %c0_i32_18 = arith.constant 0 : i32
    %41 = arith.cmpi ne, %40, %c0_i32_18 : i32
    scf.if %41 {
      %c0_19 = arith.constant 0 : index
      %c0_20 = arith.constant 0 : index
      %42 = vector.load %arg6[%c0_19, %c0_20] : memref<4x256xf32, #tpu.memory_space<vmem>>, vector<4x128xf32>
      %c0_21 = arith.constant 0 : index
      %c0_22 = arith.constant 0 : index
      %43 = vector.load %arg7[%c0_21, %c0_22] : memref<4x256xf32, #tpu.memory_space<vmem>>, vector<4x128xf32>
      %c0_23 = arith.constant 0 : index
      %c128 = arith.constant 128 : index
      %44 = vector.load %arg6[%c0_23, %c128] : memref<4x256xf32, #tpu.memory_space<vmem>>, vector<4x128xf32>
      %45 = arith.addf %42, %44 : vector<4x128xf32>
      %c0_24 = arith.constant 0 : index
      %c128_25 = arith.constant 128 : index
      %46 = vector.load %arg7[%c0_24, %c128_25] : memref<4x256xf32, #tpu.memory_space<vmem>>, vector<4x128xf32>
      %47 = arith.addf %43, %46 : vector<4x128xf32>
      %c0_26 = arith.constant 0 : index
      %c0_27 = arith.constant 0 : index
      %c0_28 = arith.constant 0 : index
      %48 = vector.load %arg4[%c0_26, %c0_27, %c0_28] : memref<1x4x128xf32, #tpu.memory_space<vmem>>, vector<1x4x128xf32>
      %49 = vector.shape_cast %48 : vector<1x4x128xf32> to vector<4x128xf32>
      %50 = vector.shape_cast %45 : vector<4x128xf32> to vector<1x4x128xf32>
      tpu.vector_store %arg4[%c0_26, %c0_27, %c0_28], %50 {strides = array<i32>} : memref<1x4x128xf32, #tpu.memory_space<vmem>>, vector<1x4x128xf32>,
      %c0_29 = arith.constant 0 : index
      %c0_30 = arith.constant 0 : index
      %c0_31 = arith.constant 0 : index
      %51 = vector.load %arg5[%c0_29, %c0_30, %c0_31] : memref<1x4x128xf32, #tpu.memory_space<vmem>>, vector<1x4x128xf32>
      %52 = vector.shape_cast %51 : vector<1x4x128xf32> to vector<4x128xf32>
      %53 = vector.shape_cast %47 : vector<4x128xf32> to vector<1x4x128xf32>
      tpu.vector_store %arg5[%c0_29, %c0_30, %c0_31], %53 {strides = array<i32>} : memref<1x4x128xf32, #tpu.memory_space<vmem>>, vector<1x4x128xf32>,
    } else {
    }
    return
  }
  func.func @transform_0(%arg0: i32, %arg1: i32) -> (i32, i32, i32) {
    %c0_i32 = arith.constant 0 : i32
    %c0_i32_0 = arith.constant 0 : i32
    return %arg0, %c0_i32, %arg1 : i32, i32, i32
  }
  func.func @transform_1(%arg0: i32, %arg1: i32) -> (i32, i32, i32) {
    %c0_i32 = arith.constant 0 : i32
    %c0_i32_0 = arith.constant 0 : i32
    return %arg0, %c0_i32, %arg1 : i32, i32, i32
  }
  func.func @transform_2(%arg0: i32, %arg1: i32) -> (i32, i32, i32) {
    %c0_i32 = arith.constant 0 : i32
    %c0_i32_0 = arith.constant 0 : i32
    %c0_i32_1 = arith.constant 0 : i32
    return %arg0, %c0_i32, %c0_i32_0 : i32, i32, i32
  }
  func.func @transform_3(%arg0: i32, %arg1: i32) -> (i32, i32, i32) {
    %c0_i32 = arith.constant 0 : i32
    %c0_i32_0 = arith.constant 0 : i32
    %c0_i32_1 = arith.constant 0 : i32
    return %arg0, %c0_i32, %c0_i32_0 : i32, i32, i32
  }
}

</mosaic_0001>

<llo_original>
// kernel: tpu_custom_call.1
$region0: #{tpu_custom_call.1}
  #allocation0 [shape = 'u32[]', space=smem, size = 0x4, offset = 0x4, fixed_abs, tag = 'smem constant byte address 0x4 - core index']
  #allocation1 [shape = 'u32[72,128]{1,0:T(1,128)}', space=vmem, size = 0x9000, scoped, tag = 'internal scratch']
  #allocation2 [shape = 'f32[4,256]{1,0:T(4,128)}', space=vmem, size = 0x1000, scoped, tag = 'scratch operand']
  #allocation3 [shape = 'f32[4,256]{1,0:T(4,128)}', space=vmem, size = 0x1000, scoped, tag = 'scratch operand']
  %s0 = inlined_call_operand.hbm [shape: f32[2,4,256], index: 0, kind: input, shape index: {}]
  %s1 = inlined_call_operand.hbm [shape: s32[2,1,256], index: 1, kind: input, shape index: {}]
  %s2 = inlined_call_operand.hbm [shape: f32[2,4,128], index: 2, kind: output, shape index: {0}]
  %s3 = inlined_call_operand.hbm [shape: f32[2,4,128], index: 3, kind: output, shape index: {1}]
  %4 = xla_tuple %s2, %s3
  %s5 = sld [smem:[#allocation0]]
  $region65: #{tpu_custom_call.1} parent=0
    _
  %s7 = ssub.s32 1, %s5
  %s8 = scalar_select 0, %s7, %s5
  $region1: #{tpu_custom_call.1} parent=0
    #allocation4 [shape = 'u8[8192]{0}', space=vmem, size = 0x2000, scoped, tag = 'input window, operand 0']
    #allocation5 [shape = 's32[2]{0}', space=sflag, size = 0x8, scoped, tag = 'scoped memory for tpu_custom_call.1']
    #allocation6 [shape = 's32[2]{0}', space=sflag, size = 0x8, scoped, tag = 'scoped memory for tpu_custom_call.1']
    #allocation7 [shape = 'u8[2048]{0}', space=vmem, size = 0x800, scoped, tag = 'input window, operand 1']
    #allocation8 [shape = 's32[2]{0}', space=sflag, size = 0x8, scoped, tag = 'scoped memory for tpu_custom_call.1']
    #allocation9 [shape = 'u8[4096]{0}', space=vmem, size = 0x1000, scoped, tag = 'output window, operand 0']
    #allocation10 [shape = 'u8[4096]{0}', space=vmem, size = 0x1000, scoped, tag = 'output window, operand 1']
    #allocation11 [shape = 's32[2]{0}', space=sflag, size = 0x8, scoped, tag = 'scoped memory for tpu_custom_call.1']
    %9 = vsyncpa [#allocation5], 0
    %s10 = scalar_lea.sflag [#allocation5], 1
    %11 = vsyncpa %s10, 0
    %12 = vsyncpa [#allocation8], 0
    %s13 = scalar_lea.sflag [#allocation8], 1
    %14 = vsyncpa %s13, 0
    %15 = vsyncpa [#allocation6], 0
    %s16 = scalar_lea.sflag [#allocation6], 1
    %17 = vsyncpa %s16, 0
    %18 = vsyncpa [#allocation11], 0
    %s19 = scalar_lea.sflag [#allocation11], 1
    %20 = vsyncpa %s19, 0
    loop: start=0, step=1, limit=4
    $region2: #{tpu_custom_call.1} parent=1 // loop_pre_header
      _
    $region3: #{tpu_custom_call.1} parent=1 // loop_header
      %s22 = sphi 0, %s26
      %p23 = scmp.ge.s32.totalorder %s22, 4
      %s29 = sphi 0, %s41
      %s30 = sphi 0, %s37
      %s31 = sphi 0, %s29
      %s32 = sphi 0, %s30
      %s33 = sphi 0, %s31
      %s34 = sphi 0, %s32
      %s46 = sphi 0, %s48
      %s49 = sphi 0, %s46
      %s50 = sphi 0, %s49
      %s66 = sphi 0, %s50
      %s74 = sphi 0, %s76
      %s77 = sphi 0, %s74
      %s78 = sphi 0, %s77
      %s94 = sphi 0, %s78
      %s100 = sphi 0, %s102
      %s103 = sphi 0, %s100
      %s104 = sphi 0, %s103
      %s120 = sphi 0, %s104
      %s126 = sphi 0, %s128
      %s129 = sphi 0, %s126
      %s130 = sphi 0, %s129
      %s146 = sphi 0, %s130
    $region4: #{tpu_custom_call.1} parent=1 // loop_header_branch
      %25 = sbr.rel (%p23) target = $region8
    $region5: #{tpu_custom_call.1} parent=1 // loop_body
      %s27 = ssub.s32 %s22, 1
      %s28 = ssub.s32 %s22, 2
      %s35 = sadd.s32 1, %s30
      %p36 = scmp.ge.s32.totalorder %s35, 1
      %s37 = scalar_select %p36, 0, %s35
      %s38 = sadd.s32 1, %s29
      %s39 = scalar_select %p36, %s38, %s29
      %p40 = scmp.ge.s32.totalorder %s39, 2
      %s41 = scalar_select %p40, 0, %s39
      %s42 = ssub.s32 %s29, %s41
      %s43 = ssub.s32 %s30, %s37
      %s44 = sor.u32 %s42, %s43
      %p45 = scmp.eq.s32.totalorder %s44, 0
      %s47 = sadd.s32 %s46, 1
      %s48 = scalar_select %p45, %s46, %s47
      %p51 = pneg %p45
      %p52 = scmp.eq.s32.totalorder %s22, 1
      %p53 = por %p51, %p52
      %p54 = scmp.ne.s32.totalorder %s46, %s49
      %p55 = scmp.eq.s32.totalorder %s22, 0
      %p56 = por %p54, %p55
      %p57 = scmp.ne.s32.totalorder %s46, %s49
      %p58 = scmp.eq.s32.totalorder %s27, 1
      %p59 = por %p57, %p58
      %p60 = scmp.ne.s32.totalorder %s49, %s50
      %p61 = scmp.eq.s32.totalorder %s27, 0
      %p62 = por %p60, %p61
      %p63 = scmp.ne.s32.totalorder %s49, %s50
      %p64 = scmp.eq.s32.totalorder %s28, 1
      %p65 = por %p63, %p64
      %p67 = scmp.ne.s32.totalorder %s50, %s66
      %p68 = scmp.eq.s32.totalorder %s28, 0
      %p69 = por %p67, %p68
      %s70 = ssub.s32 %s29, %s41
      %s71 = ssub.s32 %s30, %s37
      %s72 = sor.u32 %s70, %s71
      %p73 = scmp.eq.s32.totalorder %s72, 0
      %s75 = sadd.s32 %s74, 1
      %s76 = scalar_select %p73, %s74, %s75
      %p79 = pneg %p73
      %p80 = scmp.eq.s32.totalorder %s22, 1
      %p81 = por %p79, %p80
      %p82 = scmp.ne.s32.totalorder %s74, %s77
      %p83 = scmp.eq.s32.totalorder %s22, 0
      %p84 = por %p82, %p83
      %p85 = scmp.ne.s32.totalorder %s74, %s77
      %p86 = scmp.eq.s32.totalorder %s27, 1
      %p87 = por %p85, %p86
      %p88 = scmp.ne.s32.totalorder %s77, %s78
      %p89 = scmp.eq.s32.totalorder %s27, 0
      %p90 = por %p88, %p89
      %p91 = scmp.ne.s32.totalorder %s77, %s78
      %p92 = scmp.eq.s32.totalorder %s28, 1
      %p93 = por %p91, %p92
      %p95 = scmp.ne.s32.totalorder %s78, %s94
      %p96 = scmp.eq.s32.totalorder %s28, 0
      %p97 = por %p95, %p96
      %s98 = ssub.s32 %s29, %s41
      %p99 = scmp.eq.s32.totalorder %s98, 0
      %s101 = sadd.s32 %s100, 1
      %s102 = scalar_select %p99, %s100, %s101
      %p105 = pneg %p99
      %p106 = scmp.eq.s32.totalorder %s22, 1
      %p107 = por %p105, %p106
      %p108 = scmp.ne.s32.totalorder %s100, %s103
      %p109 = scmp.eq.s32.totalorder %s22, 0
      %p110 = por %p108, %p109
      %p111 = scmp.ne.s32.totalorder %s100, %s103
      %p112 = scmp.eq.s32.totalorder %s27, 1
      %p113 = por %p111, %p112
      %p114 = scmp.ne.s32.totalorder %s103, %s104
      %p115 = scmp.eq.s32.totalorder %s27, 0
      %p116 = por %p114, %p115
      %p117 = scmp.ne.s32.totalorder %s103, %s104
      %p118 = scmp.eq.s32.totalorder %s28, 1
      %p119 = por %p117, %p118
      %p121 = scmp.ne.s32.totalorder %s104, %s120
      %p122 = scmp.eq.s32.totalorder %s28, 0
      %p123 = por %p121, %p122
      %s124 = ssub.s32 %s29, %s41
      %p125 = scmp.eq.s32.totalorder %s124, 0
      %s127 = sadd.s32 %s126, 1
      %s128 = scalar_select %p125, %s126, %s127
      %p131 = pneg %p125
      %p132 = scmp.eq.s32.totalorder %s22, 1
      %p133 = por %p131, %p132
      %p134 = scmp.ne.s32.totalorder %s126, %s129
      %p135 = scmp.eq.s32.totalorder %s22, 0
      %p136 = por %p134, %p135
      %p137 = scmp.ne.s32.totalorder %s126, %s129
      %p138 = scmp.eq.s32.totalorder %s27, 1
      %p139 = por %p137, %p138
      %p140 = scmp.ne.s32.totalorder %s129, %s130
      %p141 = scmp.eq.s32.totalorder %s27, 0
      %p142 = por %p140, %p141
      %p143 = scmp.ne.s32.totalorder %s129, %s130
      %p144 = scmp.eq.s32.totalorder %s28, 1
      %p145 = por %p143, %p144
      %p147 = scmp.ne.s32.totalorder %s130, %s146
      %p148 = scmp.eq.s32.totalorder %s28, 0
      %p149 = por %p147, %p148
      %p150 = scmp.le.s32.totalorder 1, %s22
      %p151 = scmp.lt.s32.totalorder %s22, 3
      %p152 = pnand %p150, %p151
      %p153 = pneg %p152
      // Predicated region
      $region9: #{tpu_custom_call.1} parent=5 // pred_check
        _
      $region10: #{tpu_custom_call.1} parent=5 // pred_check_branch
        %155 = sbr.rel (%p152) target = $region12
      $region11: #{tpu_custom_call.1} parent=5 // pred_region
        %s156 = ssub.s32 %s22, 1
      $region12: #{tpu_custom_call.1} parent=5 // pred_fallthru
        _
      %p157 = scmp.lt.s32.totalorder %s22, 2
      // Predicated region
      $region13: #{tpu_custom_call.1} parent=5 // pred_check
        %p158 = pneg %p157
      $region14: #{tpu_custom_call.1} parent=5 // pred_check_branch
        %160 = sbr.rel (%p158) target = $region16
      $region15: #{tpu_custom_call.1} parent=5 // pred_region
        // Predicated region
        $region17: #{tpu_custom_call.1} parent=15 // pred_check
          %p161 = pneg %p56
        $region18: #{tpu_custom_call.1} parent=15 // pred_check_branch
          %163 = sbr.rel (%p161) target = $region20
        $region19: #{tpu_custom_call.1} parent=15 // pred_region
          %s164 = sand.u32 %s46, 1
          %s165 = scalar_lea.sflag [#allocation5], %s164
          %s166 = sand.u32 %s46, 1
          %s167 = smul.addr %s166, 8
          %s168 = scalar_lea.vmem [#allocation4], %s167
          %s169 = smul.u32 2, %s30
          %171 = vsyncadd %s165, 0
          %s172 = smul.addr %s29, 2
          %s173 = sadd.s32 %s169, %s172
          %s174 = smul.addr %s173, 4
          %s175 = scalar_lea.hbm %s0, %s174
          %s177 = sshll.u32 %s175, 4
          %s178 = int_to_ptr.hbm [resolvable:$true] %s177
          %s179 = sshll.u32 %s168, 4
          %s180 = int_to_ptr.vmem [resolvable:$true] %s179
          %182 = dma.hbm_to_vmem [thread:$0]  %s178, 128, %s180, %s165
        $region20: #{tpu_custom_call.1} parent=15 // pred_fallthru
          _
        // Predicated region
        $region21: #{tpu_custom_call.1} parent=15 // pred_check
          %p183 = pneg %p84
        $region22: #{tpu_custom_call.1} parent=15 // pred_check_branch
          %185 = sbr.rel (%p183) target = $region24
        $region23: #{tpu_custom_call.1} parent=15 // pred_region
          %s186 = sand.u32 %s74, 1
          %s187 = scalar_lea.sflag [#allocation8], %s186
          %s188 = sand.u32 %s74, 1
          %s189 = smul.addr %s188, 2
          %s190 = scalar_lea.vmem [#allocation7], %s189
          %s191 = smul.u32 2, %s30
          %193 = vsyncadd %s187, 0
          %s194 = smul.addr %s29, 2
          %s195 = sadd.s32 %s191, %s194
          %s196 = scalar_lea.hbm %s1, %s195
          %s198 = sshll.u32 %s196, 4
          %s199 = int_to_ptr.hbm [resolvable:$true] %s198
          %s200 = sshll.u32 %s190, 4
          %s201 = int_to_ptr.vmem [resolvable:$true] %s200
          %203 = dma.hbm_to_vmem [thread:$0]  %s199, 32, %s201, %s187
        $region24: #{tpu_custom_call.1} parent=15 // pred_fallthru
          _
      $region16: #{tpu_custom_call.1} parent=5 // pred_fallthru
        _
      %p204 = scmp.le.s32.totalorder 1, %s22
      %p205 = scmp.lt.s32.totalorder %s22, 3
      %p206 = pnand %p204, %p205
      %p207 = pneg %p206
      // Predicated region
      $region25: #{tpu_custom_call.1} parent=5 // pred_check
        _
      $region26: #{tpu_custom_call.1} parent=5 // pred_check_branch
        %209 = sbr.rel (%p206) target = $region28
      $region27: #{tpu_custom_call.1} parent=5 // pred_region
        %s210 = ssub.s32 %s22, 1
        %s211 = sand.u32 %s49, 1
        %s212 = scalar_lea.sflag [#allocation5], %s211
        %s213 = sand.u32 %s49, 1
        %s214 = smul.addr %s213, 8
        %s215 = scalar_lea.vmem [#allocation4], %s214
        // Predicated region
        $region29: #{tpu_custom_call.1} parent=27 // pred_check
          %p216 = pneg %p62
        $region30: #{tpu_custom_call.1} parent=27 // pred_check_branch
          %218 = sbr.rel (%p216) target = $region32
        $region31: #{tpu_custom_call.1} parent=27 // pred_region
          %220 = dma.done %s212, 128
        $region32: #{tpu_custom_call.1} parent=27 // pred_fallthru
          _
        %s221 = sand.u32 %s77, 1
        %s222 = scalar_lea.sflag [#allocation8], %s221
        %s223 = sand.u32 %s77, 1
        %s224 = smul.addr %s223, 2
        %s225 = scalar_lea.vmem [#allocation7], %s224
        // Predicated region
        $region33: #{tpu_custom_call.1} parent=27 // pred_check
          %p226 = pneg %p90
        $region34: #{tpu_custom_call.1} parent=27 // pred_check_branch
          %228 = sbr.rel (%p226) target = $region36
        $region35: #{tpu_custom_call.1} parent=27 // pred_region
          %230 = dma.done %s222, 32
        $region36: #{tpu_custom_call.1} parent=27 // pred_fallthru
          _
        %s231 = sand.u32 %s49, 1
        %s232 = scalar_lea.sflag [#allocation5], %s231
        %s233 = sand.u32 %s49, 1
        %s234 = smul.addr %s233, 8
        %s235 = scalar_lea.vmem [#allocation4], %s234
        %p236 = pneg %p62
        %p237 = pneg %p59
        %s238 = sand.u32 %s77, 1
        %s239 = scalar_lea.sflag [#allocation8], %s238
        %s240 = sand.u32 %s77, 1
        %s241 = smul.addr %s240, 2
        %s242 = scalar_lea.vmem [#allocation7], %s241
        %p243 = pneg %p90
        %p244 = pneg %p87
        %p245 = pneg %p116
        %p246 = pneg %p113
        %s247 = sand.u32 %s103, 1
        %s248 = scalar_lea.sflag [#allocation6], %s247
        %s249 = sand.u32 %s103, 1
        %s250 = smul.addr %s249, 4
        %s251 = scalar_lea.vmem [#allocation9], %s250
        %p252 = pneg %p142
        %p253 = pneg %p139
        %s254 = sand.u32 %s129, 1
        %s255 = scalar_lea.sflag [#allocation11], %s254
        %s256 = sand.u32 %s129, 1
        %s257 = smul.addr %s256, 4
        %s258 = scalar_lea.vmem [#allocation10], %s257
        %s259 = smul.u32 2, %s32
        %s260 = smul.u32 2, %s32
        %p261 = scmp.eq.s32.totalorder %s32, 0
        // Predicated region
        $region37: #{tpu_custom_call.1} parent=27 // pred_check
          %p262 = pneg %p261
        $region38: #{tpu_custom_call.1} parent=27 // pred_check_branch
          %264 = sbr.rel (%p262) target = $region40
        $region39: #{tpu_custom_call.1} parent=27 // pred_region
          %265 = vst [vmem:[#allocation2] sm:$0xff] 0.0
          %266 = vst [vmem:[#allocation3] sm:$0xff] 0.0
        $region40: #{tpu_custom_call.1} parent=27 // pred_fallthru
          _
        %v267 = vld [vmem:[%s215] sm:$0xff]
        %v268 = vld [vmem:[%s225] sm:$0x3]
        %v269 = vlaneseq
        %v270 = vand.u32 %v269, 127
        %v271 = vadd.s32 %v270, 128
        %s272 = smul.u32 %s32, 256
        %v273 = vstv %s272
        %v274 = vadd.s32 %v273, %v270
        %v275 = vadd.s32 %v273, %v271
        %vm276 = vcmp.lt.s32.totalorder %v274, 256
        %vm277 = vcmp.lt.s32.totalorder %v275, 256
        %v278 = vlaneseq
        %v279 = vshrl.u32 %v278, 7
        %v280 = vperm.slane %v268, 0
        %v281 = vperm.slane %v268, 1
        %vm282 = vcmp.eq.s32.totalorder %v279, %v280
        %vm283 = vcmp.eq.s32.totalorder %v279, %v281
        %v284 = vsel %vm276, 1, 0
        %v285 = vsel %vm277, 1, 0
        %vm286 = vcmp.eq.s32.totalorder %v284, 1
        %vm287 = vcmp.eq.s32.totalorder %v285, 1
        %vm288 = vmand %vm282, %vm286
        %vm289 = vmand %vm283, %vm287
        %291 = vst [vmem:[#allocation1] ss:$2 sm:$0xff] %v267
        %v292 = vld.sshfl [vmem:[#allocation1] sm:$0xff pattern:$0x75316420]
        %v293 = vld.sshfl [vmem:[#allocation1 + $0x8] sm:$0xff pattern:$0x75316420]
        %vm296 = vcmask 1043456
        %v297 = vsel %vm296, %v292, -inf
        %v298 = vrot.slane %v297, 4
        %v299 = vmax.f32 %v297, %v298
        %v300 = vrot.slane %v299, 2
        %v301 = vmax.f32 %v299, %v300
        %v302 = vrot.slane %v301, 1
        %v303 = vmax.f32 %v301, %v302
        %v304 = vsel %vm296, %v293, -inf
        %v305 = vrot.slane %v304, 4
        %v306 = vmax.f32 %v304, %v305
        %v307 = vrot.slane %v306, 2
        %v308 = vmax.f32 %v306, %v307
        %v309 = vrot.slane %v308, 1
        %v310 = vmax.f32 %v308, %v309
        %v313 = vrot.slane %v310, 4
        %v314 = vsel %vm296, %v303, %v313
        %v316 = vsub.f32 %v267, %v314
        %v317 = vmul.f32 %v316, 1.442695
        %v318 = vpow.pop %v317
        %320 = vst [vmem:[#allocation1] ss:$2 sm:$0xff] %v318
        %v321 = vld.sshfl [vmem:[#allocation1] sm:$0xff pattern:$0x75316420]
        %v322 = vld.sshfl [vmem:[#allocation1 + $0x8] sm:$0xff pattern:$0x75316420]
        %v325 = vsel %vm296, %v321, 0.0
        %v326 = vrot.slane %v325, 4
        %v327 = vadd.f32 %v325, %v326
        %v328 = vrot.slane %v327, 2
        %v329 = vadd.f32 %v327, %v328
        %v330 = vrot.slane %v329, 1
        %v331 = vadd.f32 %v329, %v330
        %v332 = vsel %vm296, %v322, 0.0
        %v333 = vrot.slane %v332, 4
        %v334 = vadd.f32 %v332, %v333
        %v335 = vrot.slane %v334, 2
        %v336 = vadd.f32 %v334, %v335
        %v337 = vrot.slane %v336, 1
        %v338 = vadd.f32 %v336, %v337
        %v339 = vlog2.pop %v331
        %v340 = vmul.f32 %v339, 0.6931472
        %v341 = vlog2.pop %v338
        %v342 = vmul.f32 %v341, 0.6931472
        %v343 = vadd.f32 %v340, %v303
        %v344 = vadd.f32 %v342, %v310
        %345 = vst [vmem:[#allocation1] ss:$2 sm:$0xff] %v267
        %v346 = vld.sshfl [vmem:[#allocation1] sm:$0xff pattern:$0x75316420]
        %v347 = vld.sshfl [vmem:[#allocation1 + $0x8] sm:$0xff pattern:$0x75316420]
        %v350 = vsub.f32 %v343, %v346
        %v351 = vsub.f32 %v344, %v347
        %v352 = vld [vmem:[#allocation2] sm:$0xff]
        %v353 = vsel %vm288, 1, 0
        %v354 = vsel %vm289, 1, 0
        %v355 = vcvt.s32.f32 %v353
        %v356 = vcvt.s32.f32 %v354
        %v359 = vrot.slane %v356, 4
        %v360 = vsel %vm296, %v355, %v359
        %v362 = vadd.f32 %v352, %v360
        %363 = vst [vmem:[#allocation2] sm:$0xff] %v362
        %v364 = vld [vmem:[#allocation3] sm:$0xff]
        %v365 = vsel %vm288, %v350, 0.0
        %v366 = vsel %vm289, %v351, 0.0
        %v369 = vrot.slane %v366, 4
        %v370 = vsel %vm296, %v365, %v369
        %v372 = vadd.f32 %v364, %v370
        %373 = vst [vmem:[#allocation3] sm:$0xff] %v372
        // Predicated region
        $region41: #{tpu_custom_call.1} parent=27 // pred_check
          %p374 = pneg %p261
        $region42: #{tpu_custom_call.1} parent=27 // pred_check_branch
          %376 = sbr.rel (%p374) target = $region44
        $region43: #{tpu_custom_call.1} parent=27 // pred_region
          %v377 = vld [vmem:[#allocation2] sm:$0xf]
          %v378 = vld [vmem:[#allocation3] sm:$0xf]
          %v379 = vld [vmem:[#allocation2 + $0x4] sm:$0xf]
          %v380 = vadd.f32 %v377, %v379
          %v381 = vld [vmem:[#allocation3 + $0x4] sm:$0xf]
          %v382 = vadd.f32 %v378, %v381
          %383 = vst [vmem:[%s251] sm:$0xf] %v380
          %384 = vst [vmem:[%s258] sm:$0xf] %v382
        $region44: #{tpu_custom_call.1} parent=27 // pred_fallthru
          _
        %s385 = sand.u32 %s103, 1
        %s386 = scalar_lea.sflag [#allocation6], %s385
        %s387 = sand.u32 %s103, 1
        %s388 = smul.addr %s387, 4
        %s389 = scalar_lea.vmem [#allocation9], %s388
        %s390 = sand.u32 %s129, 1
        %s391 = scalar_lea.sflag [#allocation11], %s390
        %s392 = sand.u32 %s129, 1
        %s393 = smul.addr %s392, 4
        %s394 = scalar_lea.vmem [#allocation10], %s393
        // Predicated region
        $region45: #{tpu_custom_call.1} parent=27 // pred_check
          %p395 = pneg %p113
        $region46: #{tpu_custom_call.1} parent=27 // pred_check_branch
          %397 = sbr.rel (%p395) target = $region48
        $region47: #{tpu_custom_call.1} parent=27 // pred_region
          %399 = vsyncadd %s386, 0
          %s400 = smul.addr %s31, 4
          %s401 = scalar_lea.hbm %s2, %s400
          %s403 = sshll.u32 %s389, 4
          %s404 = int_to_ptr.vmem [resolvable:$true] %s403
          %s405 = sshll.u32 %s401, 4
          %s406 = int_to_ptr.hbm [resolvable:$true] %s405
          %408 = dma.vmem_to_hbm [thread:$0]  %s404, 64, %s406, %s386
        $region48: #{tpu_custom_call.1} parent=27 // pred_fallthru
          _
        // Predicated region
        $region49: #{tpu_custom_call.1} parent=27 // pred_check
          %p409 = pneg %p139
        $region50: #{tpu_custom_call.1} parent=27 // pred_check_branch
          %411 = sbr.rel (%p409) target = $region52
        $region51: #{tpu_custom_call.1} parent=27 // pred_region
          %413 = vsyncadd %s391, 0
          %s414 = smul.addr %s31, 4
          %s415 = scalar_lea.hbm %s3, %s414
          %s417 = sshll.u32 %s394, 4
          %s418 = int_to_ptr.vmem [resolvable:$true] %s417
          %s419 = sshll.u32 %s415, 4
          %s420 = int_to_ptr.hbm [resolvable:$true] %s419
          %422 = dma.vmem_to_hbm [thread:$0]  %s418, 64, %s420, %s391
        $region52: #{tpu_custom_call.1} parent=27 // pred_fallthru
          _
      $region28: #{tpu_custom_call.1} parent=5 // pred_fallthru
        _
      %p423 = scmp.le.s32.totalorder 2, %s22
      // Predicated region
      $region53: #{tpu_custom_call.1} parent=5 // pred_check
        %p424 = pneg %p423
      $region54: #{tpu_custom_call.1} parent=5 // pred_check_branch
        %426 = sbr.rel (%p424) target = $region56
      $region55: #{tpu_custom_call.1} parent=5 // pred_region
        %s427 = ssub.s32 %s22, 2
        // Predicated region
        $region57: #{tpu_custom_call.1} parent=55 // pred_check
          %p428 = pneg %p119
        $region58: #{tpu_custom_call.1} parent=55 // pred_check_branch
          %430 = sbr.rel (%p428) target = $region60
        $region59: #{tpu_custom_call.1} parent=55 // pred_region
          %s431 = sand.u32 %s104, 1
          %s432 = scalar_lea.sflag [#allocation6], %s431
          %s433 = sand.u32 %s104, 1
          %s434 = smul.addr %s433, 4
          %s435 = scalar_lea.vmem [#allocation9], %s434
          %437 = dma.done %s432, 64
        $region60: #{tpu_custom_call.1} parent=55 // pred_fallthru
          _
        // Predicated region
        $region61: #{tpu_custom_call.1} parent=55 // pred_check
          %p438 = pneg %p145
        $region62: #{tpu_custom_call.1} parent=55 // pred_check_branch
          %440 = sbr.rel (%p438) target = $region64
        $region63: #{tpu_custom_call.1} parent=55 // pred_region
          %s441 = sand.u32 %s130, 1
          %s442 = scalar_lea.sflag [#allocation11], %s441
          %s443 = sand.u32 %s130, 1
          %s444 = smul.addr %s443, 4
          %s445 = scalar_lea.vmem [#allocation10], %s444
          %447 = dma.done %s442, 64
        $region64: #{tpu_custom_call.1} parent=55 // pred_fallthru
          _
      $region56: #{tpu_custom_call.1} parent=5 // pred_fallthru
        _
    $region6: #{tpu_custom_call.1} parent=1 // loop_footer
      %s26 = sadd.s32 1, %s22
    $region7: #{tpu_custom_call.1} parent=1 // loop_footer_branch
      %21 = sbr.rel target = $region3
    $region8: #{tpu_custom_call.1} parent=1 // loop_exit
      _
    %448 = vsyncpa [#allocation5], 1
    %s449 = scalar_lea.sflag [#allocation5], 1
    %450 = vsyncpa %s449, 1
    %451 = vsyncpa [#allocation8], 1
    %s452 = scalar_lea.sflag [#allocation8], 1
    %453 = vsyncpa %s452, 1
    %454 = vsyncpa [#allocation6], 1
    %s455 = scalar_lea.sflag [#allocation6], 1
    %456 = vsyncpa %s455, 1
    %457 = vsyncpa [#allocation11], 1
    %s458 = scalar_lea.sflag [#allocation11], 1
    %459 = vsyncpa %s458, 1

</llo_original>
